<compile_context>
chip_gen: v5e
topology: v5e:2x2
jax: 0.10.0
libtpu: 0.0.40
codegen_flags: <defaults>
</compile_context>

<pallas_src>
import jax
import jax.numpy as jnp
from jax.experimental import pallas as pl
from jax.experimental.pallas import tpu as pltpu


def _round_up(n, m):
    return ((n + m - 1) // m) * m


# ------------------------------- kernels ----------------------------------- #
def _fused_affine_kernel(x_ref, w_ref, b_ref, o_ref):
    # out = x @ W + b ; bf16 operands, f32 accumulation on the MXU, f32 bias.
    acc = jnp.dot(x_ref[...], w_ref[...], preferred_element_type=jnp.float32)
    o_ref[...] = (acc + b_ref[...]).astype(o_ref.dtype)


def _two_matmul_kernel(x_ref, w1_ref, b1_ref, w2_ref, b2_ref, o_ref):
    # out = (x @ W1t + b1) @ W2t + b2   (no activation between the layers).
    h = jnp.dot(x_ref[...], w1_ref[...], preferred_element_type=jnp.float32)
    h = h + b1_ref[...]
    acc = jnp.dot(h.astype(w2_ref.dtype), w2_ref[...],
                  preferred_element_type=jnp.float32)
    o_ref[...] = (acc + b2_ref[...]).astype(o_ref.dtype)


# --------------------------- parameter prep -------------------------------- #
def prepare_params(w1, b1, w2, b2):
    """One-time parameter prep (off the per-call hot path).

    w1: (H, Din), b1: (H,), w2: (Dout, H), b2: (Dout,)   [PyTorch layout]

    Folds l2(l1(x)) = x @ (W2 W1)^T + (W2 b1 + b2) only when it reduces work
    (Din*Dout <= H*(Din+Dout)); bottleneck-shaped MLPs keep the two-factor
    form.  Weights are stored in bf16 (MXU-native), biases stay f32.
    Note: the fold changes f32 summation order, so results differ from the
    layer-by-layer reference at the bf16-noise level; tolerances cover it.
    """
    w1 = jnp.asarray(w1, jnp.float32)
    b1 = jnp.asarray(b1, jnp.float32)
    w2 = jnp.asarray(w2, jnp.float32)
    b2 = jnp.asarray(b2, jnp.float32)
    h, din = w1.shape
    dout = w2.shape[0]
    if din * dout <= h * (din + dout):
        w = (w2 @ w1).T.astype(jnp.bfloat16)          # (Din, Dout) bf16
        b = (w2 @ b1 + b2).reshape(1, dout)           # (1, Dout)   f32
        return ("fused", (w, b))
    return ("two_stage", (w1.T.astype(jnp.bfloat16),  # (Din, H) bf16
                          b1.reshape(1, h),           # (1, H)   f32
                          w2.T.astype(jnp.bfloat16),  # (H, Dout) bf16
                          b2.reshape(1, dout)))       # (1, Dout) f32


# ------------------------------- forward ----------------------------------- #
def mlp_forward(x, params, *, max_tile=512, small_batch_threshold=128):
    """x: (B, Din) float; params from prepare_params(). Returns (B, Dout)."""
    mode, ps = params
    B, Din = x.shape
    dout = ps[1].shape[1] if mode == "fused" else ps[3].shape[1]

    # Tiny batches: fixed pallas_call overhead dwarfs the work -> plain XLA.
    if B < small_batch_threshold:
        if mode == "fused":
            w, b = ps
            return (x @ w.astype(jnp.float32) + b).astype(x.dtype)
        w1t, b1r, w2t, b2r = ps
        hmid = x @ w1t.astype(jnp.float32) + b1r
        return (hmid @ w2t.astype(jnp.float32) + b2r).astype(x.dtype)

    # Balanced batch tiling: padding < one sublane group, >= 2 grid steps.
    B8 = _round_up(B, 8)
    n_steps = max(pl.cdiv(B8, max_tile), 2)
    TB = _round_up(pl.cdiv(B8, n_steps), 8)
    B_pad = TB * n_steps

    xb = x.astype(jnp.bfloat16)
    if B_pad != B:
        xb = jnp.pad(xb, ((0, B_pad - B), (0, 0)))

    x_spec = pl.BlockSpec((TB, Din), lambda i: (i, 0))

    def resident(shape):
        # Constant index map -> weight stays resident; single-buffer it so it
        # occupies VMEM once instead of twice.
        return pl.BlockSpec(shape, lambda i: (0, 0), pipeline_mode=pl.Buffered(1))

    if mode == "fused":
        w, b = ps
        kernel = _fused_affine_kernel
        args = (xb, w, b)
        in_specs = [x_spec, resident((Din, dout)), resident((1, dout))]
        flops = 2 * B_pad * Din * dout
        resident_bytes = Din * dout * 2 + dout * 4
    else:
        w1t, b1r, w2t, b2r = ps
        H = w1t.shape[1]
        kernel = _two_matmul_kernel
        args = (xb, w1t, b1r, w2t, b2r)
        in_specs = [x_spec, resident((Din, H)), resident((1, H)),
                    resident((H, dout)), resident((1, dout))]
        flops = 2 * B_pad * H * (Din + dout)
        resident_bytes = (Din * H + H * dout) * 2 + (H + dout) * 4 + TB * H * 4

    bytes_accessed = B_pad * Din * 2 + resident_bytes + B_pad * dout * 4
    vmem_need = 2 * TB * Din * 2 + 2 * TB * dout * 4 + resident_bytes
    vmem_limit = int(min(max(4 * vmem_need, 32 * 1024 * 1024), 64 * 1024 * 1024))

    out = pl.pallas_call(
        kernel,
        out_shape=jax.ShapeDtypeStruct((B_pad, dout), x.dtype),
        grid=(n_steps,),
        in_specs=in_specs,
        out_specs=pl.BlockSpec((TB, dout), lambda i: (i, 0)),
        compiler_params=pltpu.CompilerParams(
            dimension_semantics=("parallel",),   # shard batch steps across TCs
            vmem_limit_bytes=vmem_limit,
        ),
        cost_estimate=pl.CostEstimate(
            flops=flops, transcendentals=0, bytes_accessed=bytes_accessed),
    )(*args)

    # Only batch-row padding can exist; output lanes carry real data.
    return out if B_pad == B else out[:B]


def init_linear(key, out_features, in_features):
    """Deterministic init mimicking torch.nn.Linear defaults."""
    kw, kb = jax.random.split(key)
    bound = 1.0 / float(in_features) ** 0.5
    w = jax.random.uniform(kw, (out_features, in_features), jnp.float32, -bound, bound)
    b = jax.random.uniform(kb, (out_features,), jnp.float32, -bound, bound)
    return w, b


if __name__ == "__main__":
    key = jax.random.PRNGKey(0)
    k_x1, k_x2, k_x3, k_l1, k_l2, k_l3, k_l4 = jax.random.split(key, 7)

    def ref_forward(x, w1, b1, w2, b2):
        # Same math as the PyTorch forward (layer-by-layer, f32).
        return (x @ w1.T + b1) @ w2.T + b2

    # --- MLP(num_inputs=32, num_outputs=8); hidden is hard-coded to 100 ---- #
    num_inputs, hidden, num_outputs = 32, 100, 8
    w1, b1 = init_linear(k_l1, hidden, num_inputs)
    w2, b2 = init_linear(k_l2, num_outputs, hidden)
    params = prepare_params(w1, b1, w2, b2)
    assert params[0] == "fused"

    # (a) tiny batch (module demo size) -> plain-XLA small-batch fallback.
    x_small = jax.random.normal(k_x1, (2, num_inputs), jnp.float32)
    out_small = mlp_forward(x_small, params)
    jax.block_until_ready(out_small)
    assert out_small.shape == (2, num_outputs)
    assert jnp.allclose(out_small, ref_forward(x_small, w1, b1, w2, b2),
                        atol=3e-2, rtol=3e-2)

    # (b) awkward batch (not a multiple of 8) -> fused Pallas kernel path.
    x_big = jax.random.normal(k_x2, (200, num_inputs), jnp.float32)
    out_big = mlp_forward(x_big, params)
    jax.block_until_ready(out_big)
    assert out_big.shape == (200, num_outputs)
    assert jnp.allclose(out_big, ref_forward(x_big, w1, b1, w2, b2),
                        atol=3e-2, rtol=3e-2)

    # (c) bottleneck-shaped MLP (fusion not beneficial) -> two-matmul kernel.
    din_b, dout_b = 256, 256
    w1b, b1b = init_linear(k_l3, hidden, din_b)
    w2b, b2b = init_linear(k_l4, dout_b, hidden)
    params_b = prepare_params(w1b, b1b, w2b, b2b)
    assert params_b[0] == "two_stage"
    x_b = jax.random.normal(k_x3, (136, din_b), jnp.float32)
    out_b = mlp_forward(x_b, params_b)
    jax.block_until_ready(out_b)
    assert out_b.shape == (136, dout_b)
    assert jnp.allclose(out_b, ref_forward(x_b, w1b, b1b, w2b, b2b),
                        atol=3e-2, rtol=3e-2)

    # NOTE: relu / nn.Dropout are defined on the PyTorch module but never used
    # in forward(), so they are intentionally not implemented.
    print("KERNEL_OK")
</pallas_src>

<mosaic_0001>
module attributes {stable_mosaic.version = 11 : i64} {
  func.func @_fused_affine_kernel(%arg0: i32, %arg1: memref<104x32xbf16, #tpu.memory_space<vmem>>, %arg2: memref<32x8xbf16, #tpu.memory_space<vmem>>, %arg3: memref<1x8xf32, #tpu.memory_space<vmem>>, %arg4: memref<104x8xf32, #tpu.memory_space<vmem>>) attributes {dimension_semantics = [#tpu.dimension_semantics<parallel>], iteration_bounds = array<i64: 2>, scalar_prefetch = 0 : i64, scratch_operands = 0 : i64, tpu.core_type = #tpu.core_type<tc>, window_params = [{transform_indices = @transform_0, window_bounds = array<i64: 104, 32>}, {pipeline_mode = #tpu.pipeline_mode<synchronous>, transform_indices = @transform_1, window_bounds = array<i64: 32, 8>}, {pipeline_mode = #tpu.pipeline_mode<synchronous>, transform_indices = @transform_2, window_bounds = array<i64: 1, 8>}, {transform_indices = @transform_3, window_bounds = array<i64: 104, 8>}]} {
    %c0 = arith.constant 0 : index
    %c0_0 = arith.constant 0 : index
    %0 = vector.load %arg1[%c0, %c0_0] : memref<104x32xbf16, #tpu.memory_space<vmem>>, vector<104x32xbf16>
    %c0_1 = arith.constant 0 : index
    %c0_2 = arith.constant 0 : index
    %1 = vector.load %arg2[%c0_1, %c0_2] : memref<32x8xbf16, #tpu.memory_space<vmem>>, vector<32x8xbf16>
    %cst = arith.constant dense<0.000000e+00> : vector<104x8xf32>
    %2 = tpu.matmul %0, %1, %cst {dimension_numbers = #tpu.dot_dimension_numbers<[1], [0], [0], [1], [0, 0, 1, 1], [], []>} : vector<104x32xbf16>, vector<32x8xbf16>, vector<104x8xf32> -> vector<104x8xf32>
    %c0_3 = arith.constant 0 : index
    %c0_4 = arith.constant 0 : index
    %3 = vector.load %arg3[%c0_3, %c0_4] : memref<1x8xf32, #tpu.memory_space<vmem>>, vector<1x8xf32>
    %4 = vector.broadcast %3 : vector<1x8xf32> to vector<104x8xf32>
    %5 = arith.addf %2, %4 : vector<104x8xf32>
    %c0_5 = arith.constant 0 : index
    %c0_6 = arith.constant 0 : index
    %6 = vector.load %arg4[%c0_5, %c0_6] : memref<104x8xf32, #tpu.memory_space<vmem>>, vector<104x8xf32>
    tpu.vector_store %arg4[%c0_5, %c0_6], %5 {strides = array<i32>} : memref<104x8xf32, #tpu.memory_space<vmem>>, vector<104x8xf32>,
    return
  }
  func.func @transform_0(%arg0: i32) -> (i32, i32) {
    %c0_i32 = arith.constant 0 : i32
    %c0_i32_0 = arith.constant 0 : i32
    return %arg0, %c0_i32 : i32, i32
  }
  func.func @transform_1(%arg0: i32) -> (i32, i32) {
    %c0_i32 = arith.constant 0 : i32
    %c0_i32_0 = arith.constant 0 : i32
    %c0_i32_1 = arith.constant 0 : i32
    return %c0_i32, %c0_i32_0 : i32, i32
  }
  func.func @transform_2(%arg0: i32) -> (i32, i32) {
    %c0_i32 = arith.constant 0 : i32
    %c0_i32_0 = arith.constant 0 : i32
    %c0_i32_1 = arith.constant 0 : i32
    return %c0_i32, %c0_i32_0 : i32, i32
  }
  func.func @transform_3(%arg0: i32) -> (i32, i32) {
    %c0_i32 = arith.constant 0 : i32
    %c0_i32_0 = arith.constant 0 : i32
    return %arg0, %c0_i32 : i32, i32
  }
}

</mosaic_0001>

<llo_original>
// kernel: tpu_custom_call.1
$region0: #{tpu_custom_call.1}
  #allocation0 [shape = 'u32[]', space=smem, size = 0x4, offset = 0x4, fixed_abs, tag = 'smem constant byte address 0x4 - core index']
  #allocation1 [shape = 'u32[72,128]{1,0:T(1,128)}', space=vmem, size = 0x9000, scoped, tag = 'internal scratch']
  %s0 = inlined_call_operand.vmem [shape: bf16[208,32], index: 0, kind: input, shape index: {}]
  %s1 = inlined_call_operand.vmem [shape: bf16[32,8], index: 1, kind: input, shape index: {}]
  %s2 = inlined_call_operand.vmem [shape: f32[1,8], index: 2, kind: input, shape index: {}]
  %s3 = inlined_call_operand.vmem [shape: f32[208,8], index: 3, kind: output, shape index: {}]
  %s4 = sld [smem:[#allocation0]]
  $region45: #{tpu_custom_call.1} parent=0
    _
  %s6 = ssub.s32 1, %s4
  %s7 = scalar_select 0, %s6, %s4
  loop: start=0, step=1, limit=4
  $region2: #{tpu_custom_call.1} parent=0 // loop_pre_header
    _
  $region3: #{tpu_custom_call.1} parent=0 // loop_header
    %s9 = sphi 0, %s13
    %p10 = scmp.ge.s32.totalorder %s9, 4
    %s19 = sphi 0, %s21
    %s22 = sphi 0, %s19
    %s23 = sphi 0, %s22
    %s39 = sphi 0, %s23
    %s43 = sphi 0, %s43
    %s45 = sphi 0, %s43
    %s46 = sphi 0, %s45
    %s60 = sphi 0, %s46
    %s64 = sphi 0, %s64
    %s66 = sphi 0, %s64
    %s67 = sphi 0, %s66
    %s81 = sphi 0, %s67
    %s87 = sphi 0, %s89
    %s90 = sphi 0, %s87
    %s91 = sphi 0, %s90
    %s107 = sphi 0, %s91
  $region4: #{tpu_custom_call.1} parent=0 // loop_header_branch
    %12 = sbr.rel (%p10) target = $region8
  $region5: #{tpu_custom_call.1} parent=0 // loop_body
    %s14 = ssub.s32 %s9, 1
    %s15 = ssub.s32 %s9, 2
    %s16 = sadd.s32 %s9, 1
    %s17 = ssub.s32 %s9, %s16
    %p18 = scmp.eq.s32.totalorder %s17, 0
    %s20 = sadd.s32 %s19, 1
    %s21 = scalar_select %p18, %s19, %s20
    %p24 = pneg %p18
    %p25 = scmp.eq.s32.totalorder %s9, 1
    %p26 = por %p24, %p25
    %p27 = scmp.ne.s32.totalorder %s19, %s22
    %p28 = scmp.eq.s32.totalorder %s9, 0
    %p29 = por %p27, %p28
    %p30 = scmp.ne.s32.totalorder %s19, %s22
    %p31 = scmp.eq.s32.totalorder %s14, 1
    %p32 = por %p30, %p31
    %p33 = scmp.ne.s32.totalorder %s22, %s23
    %p34 = scmp.eq.s32.totalorder %s14, 0
    %p35 = por %p33, %p34
    %p36 = scmp.ne.s32.totalorder %s22, %s23
    %p37 = scmp.eq.s32.totalorder %s15, 1
    %p38 = por %p36, %p37
    %p40 = scmp.ne.s32.totalorder %s23, %s39
    %p41 = scmp.eq.s32.totalorder %s15, 0
    %p42 = por %p40, %p41
    %s44 = sadd.s32 %s43, 1
    %p47 = scmp.eq.s32.totalorder %s9, 1
    %p48 = scmp.ne.s32.totalorder %s43, %s45
    %p49 = scmp.eq.s32.totalorder %s9, 0
    %p50 = por %p48, %p49
    %p51 = scmp.ne.s32.totalorder %s43, %s45
    %p52 = scmp.eq.s32.totalorder %s14, 1
    %p53 = por %p51, %p52
    %p54 = scmp.ne.s32.totalorder %s45, %s46
    %p55 = scmp.eq.s32.totalorder %s14, 0
    %p56 = por %p54, %p55
    %p57 = scmp.ne.s32.totalorder %s45, %s46
    %p58 = scmp.eq.s32.totalorder %s15, 1
    %p59 = por %p57, %p58
    %p61 = scmp.ne.s32.totalorder %s46, %s60
    %p62 = scmp.eq.s32.totalorder %s15, 0
    %p63 = por %p61, %p62
    %s65 = sadd.s32 %s64, 1
    %p68 = scmp.eq.s32.totalorder %s9, 1
    %p69 = scmp.ne.s32.totalorder %s64, %s66
    %p70 = scmp.eq.s32.totalorder %s9, 0
    %p71 = por %p69, %p70
    %p72 = scmp.ne.s32.totalorder %s64, %s66
    %p73 = scmp.eq.s32.totalorder %s14, 1
    %p74 = por %p72, %p73
    %p75 = scmp.ne.s32.totalorder %s66, %s67
    %p76 = scmp.eq.s32.totalorder %s14, 0
    %p77 = por %p75, %p76
    %p78 = scmp.ne.s32.totalorder %s66, %s67
    %p79 = scmp.eq.s32.totalorder %s15, 1
    %p80 = por %p78, %p79
    %p82 = scmp.ne.s32.totalorder %s67, %s81
    %p83 = scmp.eq.s32.totalorder %s15, 0
    %p84 = por %p82, %p83
    %s85 = ssub.s32 %s9, %s16
    %p86 = scmp.eq.s32.totalorder %s85, 0
    %s88 = sadd.s32 %s87, 1
    %s89 = scalar_select %p86, %s87, %s88
    %p92 = pneg %p86
    %p93 = scmp.eq.s32.totalorder %s9, 1
    %p94 = por %p92, %p93
    %p95 = scmp.ne.s32.totalorder %s87, %s90
    %p96 = scmp.eq.s32.totalorder %s9, 0
    %p97 = por %p95, %p96
    %p98 = scmp.ne.s32.totalorder %s87, %s90
    %p99 = scmp.eq.s32.totalorder %s14, 1
    %p100 = por %p98, %p99
    %p101 = scmp.ne.s32.totalorder %s90, %s91
    %p102 = scmp.eq.s32.totalorder %s14, 0
    %p103 = por %p101, %p102
    %p104 = scmp.ne.s32.totalorder %s90, %s91
    %p105 = scmp.eq.s32.totalorder %s15, 1
    %p106 = por %p104, %p105
    %p108 = scmp.ne.s32.totalorder %s91, %s107
    %p109 = scmp.eq.s32.totalorder %s15, 0
    %p110 = por %p108, %p109
    %p111 = scmp.le.s32.totalorder 1, %s9
    %p112 = scmp.lt.s32.totalorder %s9, 3
    %p113 = pnand %p111, %p112
    %p114 = pneg %p113
    // Predicated region
    $region9: #{tpu_custom_call.1} parent=5 // pred_check
      _
    $region10: #{tpu_custom_call.1} parent=5 // pred_check_branch
      %116 = sbr.rel (%p113) target = $region12
    $region11: #{tpu_custom_call.1} parent=5 // pred_region
      %s117 = ssub.s32 %s9, 1
      // Predicated region
      $region13: #{tpu_custom_call.1} parent=11 // pred_check
        %p118 = pneg %p56
      $region14: #{tpu_custom_call.1} parent=11 // pred_check_branch
        %120 = sbr.rel (%p118) target = $region16
      $region15: #{tpu_custom_call.1} parent=11 // pred_region
        _
      $region16: #{tpu_custom_call.1} parent=11 // pred_fallthru
        _
      // Predicated region
      $region17: #{tpu_custom_call.1} parent=11 // pred_check
        %p121 = pneg %p77
      $region18: #{tpu_custom_call.1} parent=11 // pred_check_branch
        %123 = sbr.rel (%p121) target = $region20
      $region19: #{tpu_custom_call.1} parent=11 // pred_region
        _
      $region20: #{tpu_custom_call.1} parent=11 // pred_fallthru
        _
    $region12: #{tpu_custom_call.1} parent=5 // pred_fallthru
      _
    %p124 = scmp.lt.s32.totalorder %s9, 2
    // Predicated region
    $region21: #{tpu_custom_call.1} parent=5 // pred_check
      %p125 = pneg %p124
    $region22: #{tpu_custom_call.1} parent=5 // pred_check_branch
      %127 = sbr.rel (%p125) target = $region24
    $region23: #{tpu_custom_call.1} parent=5 // pred_region
      // Predicated region
      $region25: #{tpu_custom_call.1} parent=23 // pred_check
        %p128 = pneg %p29
      $region26: #{tpu_custom_call.1} parent=23 // pred_check_branch
        %130 = sbr.rel (%p128) target = $region28
      $region27: #{tpu_custom_call.1} parent=23 // pred_region
        %s131 = smul.u32 13, %s9
        %p132 = scmp.lt.s32.totalorder %s131, 25
        %s133 = scalar_select %p132, %s131, 25
        %s134 = smul.addr %s133, 4
        %s135 = scalar_lea.vmem %s0, %s134
        %s136 = smul.u32 13, %s9
      $region28: #{tpu_custom_call.1} parent=23 // pred_fallthru
        _
    $region24: #{tpu_custom_call.1} parent=5 // pred_fallthru
      _
    %p137 = scmp.le.s32.totalorder 1, %s9
    %p138 = scmp.lt.s32.totalorder %s9, 3
    %p139 = pnand %p137, %p138
    %p140 = pneg %p139
    // Predicated region
    $region29: #{tpu_custom_call.1} parent=5 // pred_check
      _
    $region30: #{tpu_custom_call.1} parent=5 // pred_check_branch
      %142 = sbr.rel (%p139) target = $region32
    $region31: #{tpu_custom_call.1} parent=5 // pred_region
      %s143 = ssub.s32 %s9, 1
      %s144 = smul.u32 13, %s14
      %p145 = scmp.lt.s32.totalorder %s144, 25
      %s146 = scalar_select %p145, %s144, 25
      %s147 = smul.addr %s146, 4
      %s148 = scalar_lea.vmem %s0, %s147
      %p149 = pneg %p35
      %p150 = pneg %p32
      %p151 = pneg %p56
      %p152 = pneg %p53
      %p153 = pneg %p77
      %p154 = pneg %p74
      %p155 = pneg %p103
      %p156 = pneg %p100
      %s157 = smul.u32 13, %s14
      %p158 = scmp.lt.s32.totalorder %s157, 25
      %s159 = scalar_select %p158, %s157, 25
      %s160 = smul.addr %s159, 8
      %s161 = scalar_lea.vmem %s3, %s160
      %s162 = smul.u32 13, %s14
      %p163 = scmp.lt.s32.totalorder %s162, 25
      %s164 = scalar_select %p163, %s162, 25
      %s165 = smul.addr %s164, 4
      %s166 = scalar_lea.vmem %s0, %s165
      %s167 = smul.u32 13, %s14
      %s168 = smul.u32 13, %s14
      %p169 = scmp.lt.s32.totalorder %s168, 25
      %s170 = scalar_select %p169, %s168, 25
      %s171 = smul.addr %s170, 8
      %s172 = scalar_lea.vmem %s3, %s171
      %s173 = smul.u32 13, %s14
      %v175 = vld [vmem:[%s166] sm:$0xf]
      %v176 = vld [vmem:[%s166 + $0x4] sm:$0xf]
      %v177 = vld [vmem:[%s166 + $0x8] sm:$0xf]
      %v178 = vld [vmem:[%s166 + $0xc] sm:$0xf]
      %v179 = vld [vmem:[%s166 + $0x10] sm:$0xf]
      %v180 = vld [vmem:[%s166 + $0x14] sm:$0xf]
      %v181 = vld [vmem:[%s166 + $0x18] sm:$0xf]
      %v182 = vld [vmem:[%s166 + $0x1c] sm:$0xf]
      %v183 = vld [vmem:[%s166 + $0x20] sm:$0xf]
      %v184 = vld [vmem:[%s166 + $0x24] sm:$0xf]
      %v185 = vld [vmem:[%s166 + $0x28] sm:$0xf]
      %v186 = vld [vmem:[%s166 + $0x2c] sm:$0xf]
      %v187 = vld [vmem:[%s166 + $0x30] sm:$0xf]
      %v188 = vld [vmem:[%s1] sm:$0xf]
      %v189 = vld [vmem:[%s1 + $0x4] sm:$0xf]
      %v190 = vld [vmem:[%s1 + $0x8] sm:$0xf]
      %v191 = vld [vmem:[%s1 + $0xc] sm:$0xf]
      %v192 = vld [vmem:[%s2] sm:$0x1]
      %v194 = vperm.slane %v192, 0
      %v209 = vunpack.c.l.b16 %v175
      %v210 = vunpack.c.l.b16 %v176
      %v211 = vunpack.c.l.b16 %v177
      %v212 = vunpack.c.l.b16 %v178
      %v213 = vunpack.c.l.b16 %v179
      %v214 = vunpack.c.l.b16 %v180
      %v215 = vunpack.c.l.b16 %v181
      %v216 = vunpack.c.l.b16 %v182
      %v217 = vunpack.c.l.b16 %v183
      %v218 = vunpack.c.l.b16 %v184
      %v219 = vunpack.c.l.b16 %v185
      %v220 = vunpack.c.l.b16 %v186
      %v221 = vunpack.c.l.b16 %v187
      %v222 = vpack.c.b16 %v210, %v209
      %v223 = vpack.c.b16 %v212, %v211
      %v224 = vpack.c.b16 %v214, %v213
      %v225 = vpack.c.b16 %v216, %v215
      %v226 = vpack.c.b16 %v218, %v217
      %v227 = vpack.c.b16 %v220, %v219
      %v228 = vpack.c.b16 %v221, %v221
      %v233 = vunpack.c.l.b16 %v188
      %v234 = vunpack.c.l.b16 %v189
      %v235 = vunpack.c.l.b16 %v190
      %v236 = vunpack.c.l.b16 %v191
      %v237 = vpack.c.b16 %v234, %v233
      %v238 = vpack.c.b16 %v236, %v235
      %vm241 = vcmask 261120
      %v243 = vsel %vm241, %v222, 0
      %v246 = vsel %vm241, %v223, 0
      %v249 = vsel %vm241, %v224, 0
      %v252 = vsel %vm241, %v225, 0
      %v255 = vsel %vm241, %v226, 0
      %v258 = vsel %vm241, %v227, 0
      %v261 = vsel %vm241, %v228, 0
      %263 = vmatpush.bf16.msra.mxu0 0
      %264 = vmatpush.bf16.msra.mxu0 0
      %265 = vmatpush.bf16.msra.mxu0 0
      %266 = vmatpush.bf16.msra.mxu0 0
      %267 = vmatpush.bf16.msra.mxu0 0
      %268 = vmatpush.bf16.msra.mxu0 0
      %269 = vmatpush.bf16.msra.mxu0 %v238
      %270 = vmatpush.bf16.msra.mxu0 %v237
      %271 = vmatmul.bf16.gmra.mxu0 %v243
      %v272 = vpop.f32.mrf.mxu0
      %v273 = vadd.f32 %v194, %v272
      %v274 = vpop.f32.mrf.mxu0
      %v275 = vadd.f32 %v194, %v274
      %276 = vmatmul.bf16.gmra.mxu0 %v246
      %v277 = vpop.f32.mrf.mxu0
      %v278 = vadd.f32 %v194, %v277
      %v279 = vpop.f32.mrf.mxu0
      %v280 = vadd.f32 %v194, %v279
      %281 = vmatmul.bf16.gmra.mxu0 %v249
      %v282 = vpop.f32.mrf.mxu0
      %v283 = vadd.f32 %v194, %v282
      %v284 = vpop.f32.mrf.mxu0
      %v285 = vadd.f32 %v194, %v284
      %286 = vmatmul.bf16.gmra.mxu0 %v252
      %v287 = vpop.f32.mrf.mxu0
      %v288 = vadd.f32 %v194, %v287
      %v289 = vpop.f32.mrf.mxu0
      %v290 = vadd.f32 %v194, %v289
      %291 = vmatmul.bf16.gmra.mxu0 %v255
      %v292 = vpop.f32.mrf.mxu0
      %v293 = vadd.f32 %v194, %v292
      %v294 = vpop.f32.mrf.mxu0
      %v295 = vadd.f32 %v194, %v294
      %296 = vmatmul.bf16.gmra.mxu0 %v258
      %v297 = vpop.f32.mrf.mxu0
      %v298 = vadd.f32 %v194, %v297
      %v299 = vpop.f32.mrf.mxu0
      %v300 = vadd.f32 %v194, %v299
      %301 = vmatmul.bf16.gmra.mxu0 %v261
      %v302 = vpop.f32.mrf.mxu0
      %v303 = vadd.f32 %v194, %v302
      %v304 = vpop.f32.mrf.mxu0
      %305 = vdwg.mxu0
      %vm306 = vcmask 64512
      %307 = vst.msk [vmem:[%s172] sm:$0xff] %vm306, %v273
      %308 = vst.msk [vmem:[%s172 + $0x8] sm:$0xff] %vm306, %v275
      %309 = vst.msk [vmem:[%s172 + $0x10] sm:$0xff] %vm306, %v278
      %310 = vst.msk [vmem:[%s172 + $0x18] sm:$0xff] %vm306, %v280
      %311 = vst.msk [vmem:[%s172 + $0x20] sm:$0xff] %vm306, %v283
      %312 = vst.msk [vmem:[%s172 + $0x28] sm:$0xff] %vm306, %v285
      %313 = vst.msk [vmem:[%s172 + $0x30] sm:$0xff] %vm306, %v288
      %314 = vst.msk [vmem:[%s172 + $0x38] sm:$0xff] %vm306, %v290
      %315 = vst.msk [vmem:[%s172 + $0x40] sm:$0xff] %vm306, %v293
      %316 = vst.msk [vmem:[%s172 + $0x48] sm:$0xff] %vm306, %v295
      %317 = vst.msk [vmem:[%s172 + $0x50] sm:$0xff] %vm306, %v298
      %318 = vst.msk [vmem:[%s172 + $0x58] sm:$0xff] %vm306, %v300
      %319 = vst.msk [vmem:[%s172 + $0x60] sm:$0xff] %vm306, %v303
      %s320 = smul.u32 13, %s14
      %p321 = scmp.lt.s32.totalorder %s320, 25
      %s322 = scalar_select %p321, %s320, 25
      %s323 = smul.addr %s322, 8
      %s324 = scalar_lea.vmem %s3, %s323
      // Predicated region
      $region33: #{tpu_custom_call.1} parent=31 // pred_check
        %p325 = pneg %p100
      $region34: #{tpu_custom_call.1} parent=31 // pred_check_branch
        %327 = sbr.rel (%p325) target = $region36
      $region35: #{tpu_custom_call.1} parent=31 // pred_region
        %s328 = smul.u32 13, %s14
      $region36: #{tpu_custom_call.1} parent=31 // pred_fallthru
        _
    $region32: #{tpu_custom_call.1} parent=5 // pred_fallthru
      _
    %p329 = scmp.le.s32.totalorder 2, %s9
    // Predicated region
    $region37: #{tpu_custom_call.1} parent=5 // pred_check
      %p330 = pneg %p329
    $region38: #{tpu_custom_call.1} parent=5 // pred_check_branch
      %332 = sbr.rel (%p330) target = $region40
    $region39: #{tpu_custom_call.1} parent=5 // pred_region
      %s333 = ssub.s32 %s9, 2
      // Predicated region
      $region41: #{tpu_custom_call.1} parent=39 // pred_check
        %p334 = pneg %p106
      $region42: #{tpu_custom_call.1} parent=39 // pred_check_branch
        %336 = sbr.rel (%p334) target = $region44
      $region43: #{tpu_custom_call.1} parent=39 // pred_region
        %s337 = smul.u32 13, %s15
        %p338 = scmp.lt.s32.totalorder %s337, 25
        %s339 = scalar_select %p338, %s337, 25
        %s340 = smul.addr %s339, 8
        %s341 = scalar_lea.vmem %s3, %s340
      $region44: #{tpu_custom_call.1} parent=39 // pred_fallthru
        _
    $region40: #{tpu_custom_call.1} parent=5 // pred_fallthru
      _
  $region6: #{tpu_custom_call.1} parent=0 // loop_footer
    %s13 = sadd.s32 1, %s9
  $region7: #{tpu_custom_call.1} parent=0 // loop_footer_branch
    %8 = sbr.rel target = $region3
  $region8: #{tpu_custom_call.1} parent=0 // loop_exit
    _

</llo_original>
